<compile_context>
chip_gen: v7x
topology: tpu7x:2x2x1
jax: 0.10.0
libtpu: 0.0.40
codegen_flags: <defaults>
</compile_context>

<pallas_src>
import functools
import math

import numpy as np
import jax
import jax.numpy as jnp
from jax.experimental import pallas as pl
from jax.experimental.pallas import tpu as pltpu


# ----------------------------------------------------------------------------
# Host-side constants: fused 2-D DFT matrix F2D = kron(F_H, F_W) (symmetric).
# Built once per (H, W) in float64, cached.
# ----------------------------------------------------------------------------
@functools.lru_cache(maxsize=None)
def _dft2_matrices(h, w):
    def dft(n):
        idx = np.arange(n)
        mn = (idx[:, None] * idx[None, :]) % n          # exact mod-N product
        ang = (-2.0 * math.pi / n) * mn.astype(np.float64)
        return np.cos(ang), np.sin(ang)

    fh_re, fh_im = dft(h)
    fw_re, fw_im = dft(w)
    f_re = np.kron(fh_re, fw_re) - np.kron(fh_im, fw_im)   # (HW, HW)
    f_im = np.kron(fh_re, fw_im) + np.kron(fh_im, fw_re)   # (HW, HW)
    return (jnp.asarray(f_re, jnp.float32), jnp.asarray(f_im, jnp.float32))


def _pick_row_tile(rows, target=256):
    """Largest multiple-of-8 divisor of `rows` that is <= target.

    If that tile would collapse the grid to a single step, halve it (when an
    aligned divisor exists) so v7x's two TensorCores and the DMA pipeline both
    have >= 2 steps to work with.
    """
    if rows <= 8:
        return rows
    divs = [r for r in range(8, rows + 1, 8) if rows % r == 0]
    if not divs:
        return rows                                   # no aligned divisor
    small = [r for r in divs if r <= target]
    tile = max(small) if small else min(divs)
    if tile == rows:                                   # expose >= 2 grid steps
        halves = [r for r in divs if r <= rows // 2]
        if halves:
            tile = max(halves)
    return tile


def _const_spec(shape):
    """BlockSpec for a grid-invariant input; single-buffer it when supported."""
    idx = lambda g, _n=len(shape): (0,) * _n
    buffered = getattr(pl, "Buffered", None)
    if buffered is not None:
        try:
            return pl.BlockSpec(shape, idx, pipeline_mode=buffered(1))
        except TypeError:
            pass
    return pl.BlockSpec(shape, idx)


# ----------------------------------------------------------------------------
# Kernel: per row-block (R, HW) slab -> fft2, product, ifft2, |.|, residual.
# ----------------------------------------------------------------------------
def fdpa_kernel(x_ref, x1_ref, x2_ref, fre_ref, fim_ref,
                alpha_ref, beta_ref, o_ref):
    x = x_ref[...]                       # (R, HW)
    x1 = x1_ref[...]                     # (R, HW)
    x2 = x2_ref[...]                     # (R, HW)
    f_re = fre_ref[...]                  # (HW, HW)
    f_im = fim_ref[...]                  # (HW, HW)

    # fft2(x2): two (R, HW) @ (HW, HW) matmuls (K = H*W fills the MXU).
    y_re = jnp.dot(x2, f_re, preferred_element_type=jnp.float32)
    y_im = jnp.dot(x2, f_im, preferred_element_type=jnp.float32)

    # x1 * fft2(x2)  (real * complex, elementwise on the VPU).
    o_re = x1 * y_re
    o_im = x1 * y_im

    # ifft2 from the forward DFT halves (F symmetric, ifft = conj(F)/HW).
    # The 1/HW scale is folded into alpha on the host side.
    z_re = (jnp.dot(o_re, f_re, preferred_element_type=jnp.float32)
            + jnp.dot(o_im, f_im, preferred_element_type=jnp.float32))
    z_im = (jnp.dot(o_im, f_re, preferred_element_type=jnp.float32)
            - jnp.dot(o_re, f_im, preferred_element_type=jnp.float32))

    mag = jnp.sqrt(z_re * z_re + z_im * z_im)          # |ifft2(.)| * HW

    # out = |ifft2(x1 * fft2(x2))| * alpha + x * beta   (alpha pre-divided by HW)
    o_ref[...] = mag * alpha_ref[...] + x * beta_ref[...]


# ----------------------------------------------------------------------------
# Wrapper
# ----------------------------------------------------------------------------
def fdpa(x, w1, b1, w2, b2, alpha, beta, *, row_tile=None):
    B, C, H, W = x.shape
    HW = H * W
    rows = B * C

    f_re, f_im = _dft2_matrices(H, W)

    # 1x1 convs hoisted to a tiny XLA matmul (contraction over C only); the
    # kernel receives lane-dense (rows, HW) slabs of x, x1, x2.
    xf = x.reshape(B, C, HW)
    x1 = (jnp.einsum('oc,bcl->bol', w1, xf) + b1[None, :, None]).reshape(rows, HW)
    x2 = (jnp.einsum('oc,bcl->bol', w2, xf) + b2[None, :, None]).reshape(rows, HW)
    x_rows = xf.reshape(rows, HW)

    # Per-row alpha/beta; fold the 1/(H*W) inverse-FFT scale into alpha.
    alpha_rows = (jnp.tile(alpha, B) * (1.0 / float(HW)))[:, None]   # (rows, 1)
    beta_rows = jnp.tile(beta, B)[:, None]                           # (rows, 1)

    R = _pick_row_tile(rows) if row_tile is None else row_tile
    assert rows % R == 0 and (R % 8 == 0 or R == rows)
    grid = (rows // R,)

    # VMEM budget from the actual block sizes (streamed slabs double-buffered,
    # DFT constants single-buffered, generous headroom for intermediates).
    itemsize = 4
    block_bytes = R * HW * itemsize
    const_bytes = 2 * HW * HW * itemsize
    vec_bytes = 2 * R * itemsize
    est = 4 * 2 * block_bytes + 8 * block_bytes + const_bytes + 4 * vec_bytes
    vmem_limit = int(min(100 * 1024 * 1024, max(16 * 1024 * 1024, 2 * est)))

    row_spec = pl.BlockSpec((R, HW), lambda g: (g, 0))
    vec_spec = pl.BlockSpec((R, 1), lambda g: (g, 0))

    grid_spec = pltpu.PrefetchScalarGridSpec(
        num_scalar_prefetch=0,
        grid=grid,
        in_specs=[
            row_spec,                    # x
            row_spec,                    # x1 = conv1(x)
            row_spec,                    # x2 = conv2(x)
            _const_spec((HW, HW)),       # F2D real
            _const_spec((HW, HW)),       # F2D imag
            vec_spec,                    # alpha / HW per row
            vec_spec,                    # beta per row
        ],
        out_specs=pl.BlockSpec((R, HW), lambda g: (g, 0)),
    )

    out_rows = pl.pallas_call(
        fdpa_kernel,
        out_shape=jax.ShapeDtypeStruct((rows, HW), jnp.float32),
        grid_spec=grid_spec,
        compiler_params=pltpu.CompilerParams(
            dimension_semantics=("parallel",),
            vmem_limit_bytes=vmem_limit,
        ),
    )(x_rows, x1, x2, f_re, f_im, alpha_rows, beta_rows)

    return out_rows.reshape(B, C, H, W)


def fdpa_reference(x, w1, b1, w2, b2, alpha, beta):
    """Plain-JAX mirror of the PyTorch forward (for validation)."""
    x1 = jnp.einsum('oc,bchw->bohw', w1, x) + b1[None, :, None, None]
    x2 = jnp.einsum('oc,bchw->bohw', w2, x) + b2[None, :, None, None]
    x2_fft = jnp.fft.fft2(x2)
    out = jnp.abs(jnp.fft.ifft2(x1 * x2_fft, axes=(-2, -1)))
    return out * alpha[None, :, None, None] + x * beta[None, :, None, None]


if __name__ == "__main__":
    B, C, H, W = 2, 4, 16, 16
    key = jax.random.PRNGKey(0)
    ks = jax.random.split(key, 7)

    x = jax.random.normal(ks[0], (B, C, H, W), jnp.float32)
    # Parameter shapes follow the module __init__ (1x1 conv weights squeezed to
    # (C, C)). PyTorch init would be alpha=0, beta=1; use deterministic random
    # values so the FFT path is actually exercised by the numerical check.
    w1 = jax.random.normal(ks[1], (C, C), jnp.float32) * 0.1
    b1 = jax.random.normal(ks[2], (C,), jnp.float32) * 0.1
    w2 = jax.random.normal(ks[3], (C, C), jnp.float32) * 0.1
    b2 = jax.random.normal(ks[4], (C,), jnp.float32) * 0.1
    alpha = jax.random.normal(ks[5], (C,), jnp.float32) * 0.1
    beta = 1.0 + jax.random.normal(ks[6], (C,), jnp.float32) * 0.1

    fdpa_jit = jax.jit(fdpa)             # cached jit: constants built once
    out = fdpa_jit(x, w1, b1, w2, b2, alpha, beta)
    out = jax.block_until_ready(out)

    ref = fdpa_reference(x, w1, b1, w2, b2, alpha, beta)
    err = float(jnp.max(jnp.abs(out - ref)))
    assert err < 1e-3, f"max abs error {err}"
    print("KERNEL_OK")
</pallas_src>

<mosaic_0001>
module attributes {stable_mosaic.version = 11 : i64} {
  func.func @fdpa_kernel(%arg0: i32, %arg1: memref<8x256xf32, #tpu.memory_space<vmem>>, %arg2: memref<8x256xf32, #tpu.memory_space<vmem>>, %arg3: memref<8x256xf32, #tpu.memory_space<vmem>>, %arg4: memref<256x256xf32, #tpu.memory_space<vmem>>, %arg5: memref<256x256xf32, #tpu.memory_space<vmem>>, %arg6: memref<8x1xf32, #tpu.memory_space<vmem>>, %arg7: memref<8x1xf32, #tpu.memory_space<vmem>>, %arg8: memref<8x256xf32, #tpu.memory_space<vmem>>) attributes {dimension_semantics = [#tpu.dimension_semantics<parallel>], iteration_bounds = array<i64: 1>, scalar_prefetch = 0 : i64, scratch_operands = 0 : i64, tpu.core_type = #tpu.core_type<tc>, window_params = [{transform_indices = @transform_0, window_bounds = array<i64: 8, 256>}, {transform_indices = @transform_1, window_bounds = array<i64: 8, 256>}, {transform_indices = @transform_2, window_bounds = array<i64: 8, 256>}, {pipeline_mode = #tpu.pipeline_mode<synchronous>, transform_indices = @transform_3, window_bounds = array<i64: 256, 256>}, {pipeline_mode = #tpu.pipeline_mode<synchronous>, transform_indices = @transform_4, window_bounds = array<i64: 256, 256>}, {transform_indices = @transform_5, window_bounds = array<i64: 8, 1>}, {transform_indices = @transform_6, window_bounds = array<i64: 8, 1>}, {transform_indices = @transform_7, window_bounds = array<i64: 8, 256>}]} {
    %c0 = arith.constant 0 : index
    %c0_0 = arith.constant 0 : index
    %0 = vector.load %arg1[%c0, %c0_0] : memref<8x256xf32, #tpu.memory_space<vmem>>, vector<8x256xf32>
    %c0_1 = arith.constant 0 : index
    %c0_2 = arith.constant 0 : index
    %1 = vector.load %arg2[%c0_1, %c0_2] : memref<8x256xf32, #tpu.memory_space<vmem>>, vector<8x256xf32>
    %c0_3 = arith.constant 0 : index
    %c0_4 = arith.constant 0 : index
    %2 = vector.load %arg3[%c0_3, %c0_4] : memref<8x256xf32, #tpu.memory_space<vmem>>, vector<8x256xf32>
    %c0_5 = arith.constant 0 : index
    %c0_6 = arith.constant 0 : index
    %3 = vector.load %arg4[%c0_5, %c0_6] : memref<256x256xf32, #tpu.memory_space<vmem>>, vector<256x256xf32>
    %c0_7 = arith.constant 0 : index
    %c0_8 = arith.constant 0 : index
    %4 = vector.load %arg5[%c0_7, %c0_8] : memref<256x256xf32, #tpu.memory_space<vmem>>, vector<256x256xf32>
    %cst = arith.constant dense<0.000000e+00> : vector<8x256xf32>
    %5 = tpu.matmul %2, %3, %cst {dimension_numbers = #tpu.dot_dimension_numbers<[1], [0], [0], [1], [0, 0, 1, 1], [], []>} : vector<8x256xf32>, vector<256x256xf32>, vector<8x256xf32> -> vector<8x256xf32>
    %cst_9 = arith.constant dense<0.000000e+00> : vector<8x256xf32>
    %6 = tpu.matmul %2, %4, %cst_9 {dimension_numbers = #tpu.dot_dimension_numbers<[1], [0], [0], [1], [0, 0, 1, 1], [], []>} : vector<8x256xf32>, vector<256x256xf32>, vector<8x256xf32> -> vector<8x256xf32>
    %7 = arith.mulf %1, %5 : vector<8x256xf32>
    %8 = arith.mulf %1, %6 : vector<8x256xf32>
    %cst_10 = arith.constant dense<0.000000e+00> : vector<8x256xf32>
    %9 = tpu.matmul %7, %3, %cst_10 {dimension_numbers = #tpu.dot_dimension_numbers<[1], [0], [0], [1], [0, 0, 1, 1], [], []>} : vector<8x256xf32>, vector<256x256xf32>, vector<8x256xf32> -> vector<8x256xf32>
    %cst_11 = arith.constant dense<0.000000e+00> : vector<8x256xf32>
    %10 = tpu.matmul %8, %4, %cst_11 {dimension_numbers = #tpu.dot_dimension_numbers<[1], [0], [0], [1], [0, 0, 1, 1], [], []>} : vector<8x256xf32>, vector<256x256xf32>, vector<8x256xf32> -> vector<8x256xf32>
    %11 = arith.addf %9, %10 : vector<8x256xf32>
    %cst_12 = arith.constant dense<0.000000e+00> : vector<8x256xf32>
    %12 = tpu.matmul %8, %3, %cst_12 {dimension_numbers = #tpu.dot_dimension_numbers<[1], [0], [0], [1], [0, 0, 1, 1], [], []>} : vector<8x256xf32>, vector<256x256xf32>, vector<8x256xf32> -> vector<8x256xf32>
    %cst_13 = arith.constant dense<0.000000e+00> : vector<8x256xf32>
    %13 = tpu.matmul %7, %4, %cst_13 {dimension_numbers = #tpu.dot_dimension_numbers<[1], [0], [0], [1], [0, 0, 1, 1], [], []>} : vector<8x256xf32>, vector<256x256xf32>, vector<8x256xf32> -> vector<8x256xf32>
    %14 = arith.subf %12, %13 : vector<8x256xf32>
    %15 = arith.mulf %11, %11 : vector<8x256xf32>
    %16 = arith.mulf %14, %14 : vector<8x256xf32>
    %17 = arith.addf %15, %16 : vector<8x256xf32>
    %18 = math.sqrt %17 : vector<8x256xf32>
    %c0_14 = arith.constant 0 : index
    %c0_15 = arith.constant 0 : index
    %19 = vector.load %arg6[%c0_14, %c0_15] : memref<8x1xf32, #tpu.memory_space<vmem>>, vector<8x1xf32>
    %20 = vector.broadcast %19 : vector<8x1xf32> to vector<8x256xf32>
    %21 = arith.mulf %18, %20 : vector<8x256xf32>
    %c0_16 = arith.constant 0 : index
    %c0_17 = arith.constant 0 : index
    %22 = vector.load %arg7[%c0_16, %c0_17] : memref<8x1xf32, #tpu.memory_space<vmem>>, vector<8x1xf32>
    %23 = vector.broadcast %22 : vector<8x1xf32> to vector<8x256xf32>
    %24 = arith.mulf %0, %23 : vector<8x256xf32>
    %25 = arith.addf %21, %24 : vector<8x256xf32>
    %c0_18 = arith.constant 0 : index
    %c0_19 = arith.constant 0 : index
    %26 = vector.load %arg8[%c0_18, %c0_19] : memref<8x256xf32, #tpu.memory_space<vmem>>, vector<8x256xf32>
    tpu.vector_store %arg8[%c0_18, %c0_19], %25 {strides = array<i32>} : memref<8x256xf32, #tpu.memory_space<vmem>>, vector<8x256xf32>,
    return
  }
  func.func @transform_0(%arg0: i32) -> (i32, i32) {
    %c0_i32 = arith.constant 0 : i32
    %c0_i32_0 = arith.constant 0 : i32
    return %arg0, %c0_i32 : i32, i32
  }
  func.func @transform_1(%arg0: i32) -> (i32, i32) {
    %c0_i32 = arith.constant 0 : i32
    %c0_i32_0 = arith.constant 0 : i32
    return %arg0, %c0_i32 : i32, i32
  }
  func.func @transform_2(%arg0: i32) -> (i32, i32) {
    %c0_i32 = arith.constant 0 : i32
    %c0_i32_0 = arith.constant 0 : i32
    return %arg0, %c0_i32 : i32, i32
  }
  func.func @transform_3(%arg0: i32) -> (i32, i32) {
    %c0_i32 = arith.constant 0 : i32
    %c0_i32_0 = arith.constant 0 : i32
    %c0_i32_1 = arith.constant 0 : i32
    return %c0_i32, %c0_i32_0 : i32, i32
  }
  func.func @transform_4(%arg0: i32) -> (i32, i32) {
    %c0_i32 = arith.constant 0 : i32
    %c0_i32_0 = arith.constant 0 : i32
    %c0_i32_1 = arith.constant 0 : i32
    return %c0_i32, %c0_i32_0 : i32, i32
  }
  func.func @transform_5(%arg0: i32) -> (i32, i32) {
    %c0_i32 = arith.constant 0 : i32
    %c0_i32_0 = arith.constant 0 : i32
    return %arg0, %c0_i32 : i32, i32
  }
  func.func @transform_6(%arg0: i32) -> (i32, i32) {
    %c0_i32 = arith.constant 0 : i32
    %c0_i32_0 = arith.constant 0 : i32
    return %arg0, %c0_i32 : i32, i32
  }
  func.func @transform_7(%arg0: i32) -> (i32, i32) {
    %c0_i32 = arith.constant 0 : i32
    %c0_i32_0 = arith.constant 0 : i32
    return %arg0, %c0_i32 : i32, i32
  }
}

</mosaic_0001>

<llo_original>
// kernel: tile.18
$region0: #{tile.18}
  #allocation2 [shape = 's32[1]{0}', space=sflag, size = 0x4, scoped, tag = 'scoped memory for tile.18']
  %s0 = inlined_call_operand.hbm [shape: f32[4], index: 0, kind: input, shape index: {}]
  %s1 = inlined_call_operand.vmem [shape: f32[2,4], index: 1, kind: output, shape index: {}]
  $region1: #{tile.18} parent=0
    #allocation0 [shape = 'u8[512]{0}', space=vmem, size = 0x400, scoped, tag = 'operand span for operand 0']
    #allocation1 [shape = 's32[1]{0}', space=sflag, size = 0x4, scoped, tag = 'scoped memory for tile.18']
    %2 = vsyncpa [#allocation1], 0
    // Predicated region
    $region2: #{tile.18} parent=1 // pred_check
      _
    $region3: #{tile.18} parent=1 // pred_check_branch
      %4 = sbr.rel (0) target = $region5
    $region4: #{tile.18} parent=1 // pred_region
      %s6 = ssub.s32 16, 16
      %7 = vsyncadd [#allocation1], %s6
      %s9 = sshll.u32 [#allocation0], 4
      %s10 = int_to_ptr.vmem [resolvable:$true] %s9
      %12 = dma.hbm_to_vmem [thread:$0]  %s0, 16, %s10, [#allocation1]
    $region5: #{tile.18} parent=1 // pred_fallthru
      _
    // Predicated region
    $region6: #{tile.18} parent=1 // pred_check
      _
    $region7: #{tile.18} parent=1 // pred_check_branch
      %14 = sbr.rel (0) target = $region9
    $region8: #{tile.18} parent=1 // pred_region
      %15 = dma.done [#allocation1], 16
    $region9: #{tile.18} parent=1 // pred_fallthru
      _
    %v16 = vld [vmem:[#allocation0] ss:$0 sm:$0xff]
    %17 = vst [vmem:[%s1] sm:$0x3] %v16
    %18 = vsyncpa [#allocation1], 1

// kernel: tile.0
$region0: #{tile.0}
  %s0 = inlined_call_operand.vmem [shape: f32[2,4], index: 0, kind: input, shape index: {}]
  %s1 = inlined_call_operand.vmem [shape: f32[8,1], index: 1, kind: output, shape index: {}]
  $region1: #{tile.0} parent=0
    #allocation0 [shape = 'u8[4096]{0}', space=vmem, size = 0x1000, scoped, tag = 'scoped mem for input reshape']
    %s3 = sshllo.u32 0, 2
    %v4 = vld [vmem:[%s0] sm:%s3]
    %5 = vst [vmem:[#allocation0] sm:%s3] %v4
    %v6 = vld [vmem:[#allocation0] sm:$0x3]
    %vm7 = vcmask 7168
    %8 = vst.msk [vmem:[%s1] ss:$4 sm:$0x3] %vm7, %v6
    %v9 = vld [vmem:[#allocation0] sm:$0x3]
    %10 = vrot.lane.b32.xlu0 %v9, 127
    %v11 = vpop.permute.xlu0 %10
    %vm12 = vcmask 7168
    %s13 = scalar_lea.vmem %s1, 1
    %14 = vst.msk [vmem:[%s13] ss:$4 sm:$0x3] %vm12, %v11
    %v15 = vld [vmem:[#allocation0] sm:$0x3]
    %16 = vrot.lane.b32.xlu0 %v15, 126
    %v17 = vpop.permute.xlu0 %16
    %vm18 = vcmask 7168
    %s19 = scalar_lea.vmem %s1, 2
    %20 = vst.msk [vmem:[%s19] ss:$4 sm:$0x3] %vm18, %v17
    %v21 = vld [vmem:[#allocation0] sm:$0x3]
    %22 = vrot.lane.b32.xlu0 %v21, 125
    %v23 = vpop.permute.xlu0 %22
    %vm24 = vcmask 7168
    %s25 = scalar_lea.vmem %s1, 3
    %26 = vst.msk [vmem:[%s25] ss:$4 sm:$0x3] %vm24, %v23

// kernel: fdpa.1
$region0: #{fdpa.1}
  #allocation0 [shape = 'u32[]', space=smem, size = 0x4, offset = 0x4, fixed_abs, tag = 'smem constant byte address 0x4 - core index']
  #allocation1 [shape = 'u32[144,128]{1,0:T(1,128)}', space=vmem, size = 0x12000, scoped, tag = 'internal scratch']
  %s0 = inlined_call_operand.vmem [shape: f32[8,256], index: 0, kind: input, shape index: {}]
  %s1 = inlined_call_operand.vmem [shape: f32[8,256], index: 1, kind: input, shape index: {}]
  %s2 = inlined_call_operand.vmem [shape: f32[8,256], index: 2, kind: input, shape index: {}]
  %s3 = inlined_call_operand.hbm [shape: f32[256,256], index: 3, kind: input, shape index: {}]
  %s4 = inlined_call_operand.vmem [shape: f32[256,256], index: 4, kind: input, shape index: {}]
  %s5 = inlined_call_operand.vmem [shape: f32[8,1], index: 5, kind: input, shape index: {}]
  %s6 = inlined_call_operand.vmem [shape: f32[8,1], index: 6, kind: input, shape index: {}]
  %s7 = inlined_call_operand.vmem [shape: f32[8,256], index: 7, kind: output, shape index: {}]
  %s8 = sld [smem:[#allocation0]]
  $region42: #{fdpa.1} parent=0
    _
  %s10 = ssub.s32 1, %s8
  %s11 = scalar_select 0, %s10, %s8
  $region1: #{fdpa.1} parent=0
    #allocation2 [shape = 'u8[262144]{0}', space=vmem, size = 0x40000, scoped, tag = 'input window, operand 3, single buffered']
    #allocation3 [shape = 's32[1]{0}', space=sflag, size = 0x4, scoped, tag = 'scoped memory for fdpa.1']
    %12 = vsyncpa [#allocation3], 0
    // Predicated region
    $region2: #{fdpa.1} parent=1 // pred_check
      _
    $region3: #{fdpa.1} parent=1 // pred_check_branch
      %14 = sbr.rel (0) target = $region5
    $region4: #{fdpa.1} parent=1 // pred_region
      _
    $region5: #{fdpa.1} parent=1 // pred_fallthru
      _
    // Predicated region
    $region6: #{fdpa.1} parent=1 // pred_check
      _
    $region7: #{fdpa.1} parent=1 // pred_check_branch
      %16 = sbr.rel (0) target = $region9
    $region8: #{fdpa.1} parent=1 // pred_region
      _
    $region9: #{fdpa.1} parent=1 // pred_fallthru
      _
    // Predicated region
    $region10: #{fdpa.1} parent=1 // pred_check
      _
    $region11: #{fdpa.1} parent=1 // pred_check_branch
      %18 = sbr.rel (0) target = $region13
    $region12: #{fdpa.1} parent=1 // pred_region
      _
    $region13: #{fdpa.1} parent=1 // pred_fallthru
      _
    // Predicated region
    $region14: #{fdpa.1} parent=1 // pred_check
      _
    $region15: #{fdpa.1} parent=1 // pred_check_branch
      %20 = sbr.rel (0) target = $region17
    $region16: #{fdpa.1} parent=1 // pred_region
      %s22 = ssub.s32 8192, 8192
      %23 = vsyncadd [#allocation3], %s22
      %s24 = sshll.u32 [#allocation2], 4
      %s25 = int_to_ptr.vmem [resolvable:$true] %s24
      %30 = dma.hbm_to_vmem [thread:$0]  %s3, 8192, %s25, [#allocation3], 256, 256, 16
    $region17: #{fdpa.1} parent=1 // pred_fallthru
      _
    // Predicated region
    $region18: #{fdpa.1} parent=1 // pred_check
      _
    $region19: #{fdpa.1} parent=1 // pred_check_branch
      %32 = sbr.rel (0) target = $region21
    $region20: #{fdpa.1} parent=1 // pred_region
      _
    $region21: #{fdpa.1} parent=1 // pred_fallthru
      _
    // Predicated region
    $region22: #{fdpa.1} parent=1 // pred_check
      _
    $region23: #{fdpa.1} parent=1 // pred_check_branch
      %34 = sbr.rel (0) target = $region25
    $region24: #{fdpa.1} parent=1 // pred_region
      _
    $region25: #{fdpa.1} parent=1 // pred_fallthru
      _
    // Predicated region
    $region26: #{fdpa.1} parent=1 // pred_check
      _
    $region27: #{fdpa.1} parent=1 // pred_check_branch
      %36 = sbr.rel (0) target = $region29
    $region28: #{fdpa.1} parent=1 // pred_region
      _
    $region29: #{fdpa.1} parent=1 // pred_fallthru
      _
    // Predicated region
    $region30: #{fdpa.1} parent=1 // pred_check
      _
    $region31: #{fdpa.1} parent=1 // pred_check_branch
      %38 = sbr.rel (0) target = $region33
    $region32: #{fdpa.1} parent=1 // pred_region
      %39 = dma.done [#allocation3], 8192
    $region33: #{fdpa.1} parent=1 // pred_fallthru
      _
    %v40 = vld [vmem:[%s0] sm:$0xff]
    %v41 = vld [vmem:[%s0 + $0x8] sm:$0xff]
    %v42 = vld [vmem:[%s1] sm:$0xff]
    %v43 = vld [vmem:[%s1 + $0x8] sm:$0xff]
    %v44 = vld [vmem:[%s2] sm:$0xff]
    %v45 = vld [vmem:[%s2 + $0x8] sm:$0xff]
    %v46 = vld [vmem:[#allocation2] sm:$0xff]
    %v47 = vld [vmem:[#allocation2 + $0x8] sm:$0xff]
    %v48 = vld [vmem:[#allocation2 + $0x10] sm:$0xff]
    %v49 = vld [vmem:[#allocation2 + $0x18] sm:$0xff]
    %v50 = vld [vmem:[#allocation2 + $0x20] sm:$0xff]
    %v51 = vld [vmem:[#allocation2 + $0x28] sm:$0xff]
    %v52 = vld [vmem:[#allocation2 + $0x30] sm:$0xff]
    %v53 = vld [vmem:[#allocation2 + $0x38] sm:$0xff]
    %v54 = vld [vmem:[#allocation2 + $0x40] sm:$0xff]
    %v55 = vld [vmem:[#allocation2 + $0x48] sm:$0xff]
    %v56 = vld [vmem:[#allocation2 + $0x50] sm:$0xff]
    %v57 = vld [vmem:[#allocation2 + $0x58] sm:$0xff]
    %v58 = vld [vmem:[#allocation2 + $0x60] sm:$0xff]
    %v59 = vld [vmem:[#allocation2 + $0x68] sm:$0xff]
    %v60 = vld [vmem:[#allocation2 + $0x70] sm:$0xff]
    %v61 = vld [vmem:[#allocation2 + $0x78] sm:$0xff]
    %v62 = vld [vmem:[#allocation2 + $0x80] sm:$0xff]
    %v63 = vld [vmem:[#allocation2 + $0x88] sm:$0xff]
    %v64 = vld [vmem:[#allocation2 + $0x90] sm:$0xff]
    %v65 = vld [vmem:[#allocation2 + $0x98] sm:$0xff]
    %v66 = vld [vmem:[#allocation2 + $0xa0] sm:$0xff]
    %v67 = vld [vmem:[#allocation2 + $0xa8] sm:$0xff]
    %v68 = vld [vmem:[#allocation2 + $0xb0] sm:$0xff]
    %v69 = vld [vmem:[#allocation2 + $0xb8] sm:$0xff]
    %v70 = vld [vmem:[#allocation2 + $0xc0] sm:$0xff]
    %v71 = vld [vmem:[#allocation2 + $0xc8] sm:$0xff]
    %v72 = vld [vmem:[#allocation2 + $0xd0] sm:$0xff]
    %v73 = vld [vmem:[#allocation2 + $0xd8] sm:$0xff]
    %v74 = vld [vmem:[#allocation2 + $0xe0] sm:$0xff]
    %v75 = vld [vmem:[#allocation2 + $0xe8] sm:$0xff]
    %v76 = vld [vmem:[#allocation2 + $0xf0] sm:$0xff]
    %v77 = vld [vmem:[#allocation2 + $0xf8] sm:$0xff]
    %v78 = vld [vmem:[#allocation2 + $0x100] sm:$0xff]
    %v79 = vld [vmem:[#allocation2 + $0x108] sm:$0xff]
    %v80 = vld [vmem:[#allocation2 + $0x110] sm:$0xff]
    %v81 = vld [vmem:[#allocation2 + $0x118] sm:$0xff]
    %v82 = vld [vmem:[#allocation2 + $0x120] sm:$0xff]
    %v83 = vld [vmem:[#allocation2 + $0x128] sm:$0xff]
    %v84 = vld [vmem:[#allocation2 + $0x130] sm:$0xff]
    %v85 = vld [vmem:[#allocation2 + $0x138] sm:$0xff]
    %v86 = vld [vmem:[#allocation2 + $0x140] sm:$0xff]
    %v87 = vld [vmem:[#allocation2 + $0x148] sm:$0xff]
    %v88 = vld [vmem:[#allocation2 + $0x150] sm:$0xff]
    %v89 = vld [vmem:[#allocation2 + $0x158] sm:$0xff]
    %v90 = vld [vmem:[#allocation2 + $0x160] sm:$0xff]
    %v91 = vld [vmem:[#allocation2 + $0x168] sm:$0xff]
    %v92 = vld [vmem:[#allocation2 + $0x170] sm:$0xff]
    %v93 = vld [vmem:[#allocation2 + $0x178] sm:$0xff]
    %v94 = vld [vmem:[#allocation2 + $0x180] sm:$0xff]
    %v95 = vld [vmem:[#allocation2 + $0x188] sm:$0xff]
    %v96 = vld [vmem:[#allocation2 + $0x190] sm:$0xff]
    %v97 = vld [vmem:[#allocation2 + $0x198] sm:$0xff]
    %v98 = vld [vmem:[#allocation2 + $0x1a0] sm:$0xff]
    %v99 = vld [vmem:[#allocation2 + $0x1a8] sm:$0xff]
    %v100 = vld [vmem:[#allocation2 + $0x1b0] sm:$0xff]
    %v101 = vld [vmem:[#allocation2 + $0x1b8] sm:$0xff]
    %v102 = vld [vmem:[#allocation2 + $0x1c0] sm:$0xff]
    %v103 = vld [vmem:[#allocation2 + $0x1c8] sm:$0xff]
    %v104 = vld [vmem:[#allocation2 + $0x1d0] sm:$0xff]
    %v105 = vld [vmem:[#allocation2 + $0x1d8] sm:$0xff]
    %v106 = vld [vmem:[#allocation2 + $0x1e0] sm:$0xff]
    %v107 = vld [vmem:[#allocation2 + $0x1e8] sm:$0xff]
    %v108 = vld [vmem:[#allocation2 + $0x1f0] sm:$0xff]
    %v109 = vld [vmem:[#allocation2 + $0x1f8] sm:$0xff]
    %v110 = vld [vmem:[%s4] sm:$0xff]
    %v111 = vld [vmem:[%s4 + $0x8] sm:$0xff]
    %v112 = vld [vmem:[%s4 + $0x10] sm:$0xff]
    %v113 = vld [vmem:[%s4 + $0x18] sm:$0xff]
    %v114 = vld [vmem:[%s4 + $0x20] sm:$0xff]
    %v115 = vld [vmem:[%s4 + $0x28] sm:$0xff]
    %v116 = vld [vmem:[%s4 + $0x30] sm:$0xff]
    %v117 = vld [vmem:[%s4 + $0x38] sm:$0xff]
    %v118 = vld [vmem:[%s4 + $0x40] sm:$0xff]
    %v119 = vld [vmem:[%s4 + $0x48] sm:$0xff]
    %v120 = vld [vmem:[%s4 + $0x50] sm:$0xff]
    %v121 = vld [vmem:[%s4 + $0x58] sm:$0xff]
    %v122 = vld [vmem:[%s4 + $0x60] sm:$0xff]
    %v123 = vld [vmem:[%s4 + $0x68] sm:$0xff]
    %v124 = vld [vmem:[%s4 + $0x70] sm:$0xff]
    %v125 = vld [vmem:[%s4 + $0x78] sm:$0xff]
    %v126 = vld [vmem:[%s4 + $0x80] sm:$0xff]
    %v127 = vld [vmem:[%s4 + $0x88] sm:$0xff]
    %v128 = vld [vmem:[%s4 + $0x90] sm:$0xff]
    %v129 = vld [vmem:[%s4 + $0x98] sm:$0xff]
    %v130 = vld [vmem:[%s4 + $0xa0] sm:$0xff]
    %v131 = vld [vmem:[%s4 + $0xa8] sm:$0xff]
    %v132 = vld [vmem:[%s4 + $0xb0] sm:$0xff]
    %v133 = vld [vmem:[%s4 + $0xb8] sm:$0xff]
    %v134 = vld [vmem:[%s4 + $0xc0] sm:$0xff]
    %v135 = vld [vmem:[%s4 + $0xc8] sm:$0xff]
    %v136 = vld [vmem:[%s4 + $0xd0] sm:$0xff]
    %v137 = vld [vmem:[%s4 + $0xd8] sm:$0xff]
    %v138 = vld [vmem:[%s4 + $0xe0] sm:$0xff]
    %v139 = vld [vmem:[%s4 + $0xe8] sm:$0xff]
    %v140 = vld [vmem:[%s4 + $0xf0] sm:$0xff]
    %v141 = vld [vmem:[%s4 + $0xf8] sm:$0xff]
    %v142 = vld [vmem:[%s4 + $0x100] sm:$0xff]
    %v143 = vld [vmem:[%s4 + $0x108] sm:$0xff]
    %v144 = vld [vmem:[%s4 + $0x110] sm:$0xff]
    %v145 = vld [vmem:[%s4 + $0x118] sm:$0xff]
    %v146 = vld [vmem:[%s4 + $0x120] sm:$0xff]
    %v147 = vld [vmem:[%s4 + $0x128] sm:$0xff]
    %v148 = vld [vmem:[%s4 + $0x130] sm:$0xff]
    %v149 = vld [vmem:[%s4 + $0x138] sm:$0xff]
    %v150 = vld [vmem:[%s4 + $0x140] sm:$0xff]
    %v151 = vld [vmem:[%s4 + $0x148] sm:$0xff]
    %v152 = vld [vmem:[%s4 + $0x150] sm:$0xff]
    %v153 = vld [vmem:[%s4 + $0x158] sm:$0xff]
    %v154 = vld [vmem:[%s4 + $0x160] sm:$0xff]
    %v155 = vld [vmem:[%s4 + $0x168] sm:$0xff]
    %v156 = vld [vmem:[%s4 + $0x170] sm:$0xff]
    %v157 = vld [vmem:[%s4 + $0x178] sm:$0xff]
    %v158 = vld [vmem:[%s4 + $0x180] sm:$0xff]
    %v159 = vld [vmem:[%s4 + $0x188] sm:$0xff]
    %v160 = vld [vmem:[%s4 + $0x190] sm:$0xff]
    %v161 = vld [vmem:[%s4 + $0x198] sm:$0xff]
    %v162 = vld [vmem:[%s4 + $0x1a0] sm:$0xff]
    %v163 = vld [vmem:[%s4 + $0x1a8] sm:$0xff]
    %v164 = vld [vmem:[%s4 + $0x1b0] sm:$0xff]
    %v165 = vld [vmem:[%s4 + $0x1b8] sm:$0xff]
    %v166 = vld [vmem:[%s4 + $0x1c0] sm:$0xff]
    %v167 = vld [vmem:[%s4 + $0x1c8] sm:$0xff]
    %v168 = vld [vmem:[%s4 + $0x1d0] sm:$0xff]
    %v169 = vld [vmem:[%s4 + $0x1d8] sm:$0xff]
    %v170 = vld [vmem:[%s4 + $0x1e0] sm:$0xff]
    %v171 = vld [vmem:[%s4 + $0x1e8] sm:$0xff]
    %v172 = vld [vmem:[%s4 + $0x1f0] sm:$0xff]
    %v173 = vld [vmem:[%s4 + $0x1f8] sm:$0xff]
    %174 = vmatprep.subr.mxu0 %v47
    %175 = vmatpush1.msra.mxu0 %v46
    %176 = vmatprep.subr.mxu0 %v49
    %177 = vmatpush1.msra.mxu0 %v48
    %178 = vmatprep.subr.mxu0 %v51
    %179 = vmatpush1.msra.mxu0 %v50
    %180 = vmatprep.subr.mxu0 %v53
    %181 = vmatpush1.msra.mxu0 %v52
    %182 = vmatprep.subr.mxu0 %v55
    %183 = vmatpush1.msra.mxu0 %v54
    %184 = vmatprep.subr.mxu0 %v57
    %185 = vmatpush1.msra.mxu0 %v56
    %186 = vmatprep.subr.mxu0 %v59
    %187 = vmatpush1.msra.mxu0 %v58
    %188 = vmatprep.subr.mxu0 %v61
    %189 = vmatpush1.msra.mxu0 %v60
    %190 = vmatprep.subr.mxu0 %v63
    %191 = vmatpush1.msra.mxu0 %v62
    %192 = vmatprep.subr.mxu0 %v65
    %193 = vmatpush1.msra.mxu0 %v64
    %194 = vmatprep.subr.mxu0 %v67
    %195 = vmatpush1.msra.mxu0 %v66
    %196 = vmatprep.subr.mxu0 %v69
    %197 = vmatpush1.msra.mxu0 %v68
    %198 = vmatprep.subr.mxu0 %v71
    %199 = vmatpush1.msra.mxu0 %v70
    %200 = vmatprep.subr.mxu0 %v73
    %201 = vmatpush1.msra.mxu0 %v72
    %202 = vmatprep.subr.mxu0 %v75
    %203 = vmatpush1.msra.mxu0 %v74
    %204 = vmatprep.subr.mxu0 %v77
    %205 = vmatpush1.msra.mxu0 %v76
    %206 = vmatprep.subr.mxu0 %v79
    %207 = vmatpush1.msra.mxu0 %v78
    %208 = vmatprep.subr.mxu0 %v81
    %209 = vmatpush1.msra.mxu0 %v80
    %210 = vmatprep.subr.mxu0 %v83
    %211 = vmatpush1.msra.mxu0 %v82
    %212 = vmatprep.subr.mxu0 %v85
    %213 = vmatpush1.msra.mxu0 %v84
    %214 = vmatprep.subr.mxu0 %v87
    %215 = vmatpush1.msra.mxu0 %v86
    %216 = vmatprep.subr.mxu0 %v89
    %217 = vmatpush1.msra.mxu0 %v88
    %218 = vmatprep.subr.mxu0 %v91
    %219 = vmatpush1.msra.mxu0 %v90
    %220 = vmatprep.subr.mxu0 %v93
    %221 = vmatpush1.msra.mxu0 %v92
    %222 = vmatprep.subr.mxu0 %v95
    %223 = vmatpush1.msra.mxu0 %v94
    %224 = vmatprep.subr.mxu0 %v97
    %225 = vmatpush1.msra.mxu0 %v96
    %226 = vmatprep.subr.mxu0 %v99
    %227 = vmatpush1.msra.mxu0 %v98
    %228 = vmatprep.subr.mxu0 %v101
    %229 = vmatpush1.msra.mxu0 %v100
    %230 = vmatprep.subr.mxu0 %v103
    %231 = vmatpush1.msra.mxu0 %v102
    %232 = vmatprep.subr.mxu0 %v105
    %233 = vmatpush1.msra.mxu0 %v104
    %234 = vmatprep.subr.mxu0 %v107
    %235 = vmatpush1.msra.mxu0 %v106
    %236 = vmatprep.subr.mxu0 %v109
    %237 = vmatpush1.msra.mxu0 %v108
    %238 = vmatprep.mubr.f32.mxu0 %v45
    %239 = vmatmul.mubr.f32.gmra.mrb[0].mxu0 %v44
    %v240 = vpop.f32.mrb[0].mxu0
    %v241 = vadd.f32 0.0, %v240
    %v242 = vpop.f32.mrb[0].mxu0
    %v243 = vadd.f32 0.0, %v242
    %244 = vdwg.mxu0
    %245 = vmatprep.subr.mxu0 %v111
    %246 = vmatpush1.msra.mxu0 %v110
    %247 = vmatprep.subr.mxu0 %v113
    %248 = vmatpush1.msra.mxu0 %v112
    %249 = vmatprep.subr.mxu0 %v115
    %250 = vmatpush1.msra.mxu0 %v114
    %251 = vmatprep.subr.mxu0 %v117
    %252 = vmatpush1.msra.mxu0 %v116
    %253 = vmatprep.subr.mxu0 %v119
    %254 = vmatpush1.msra.mxu0 %v118
    %255 = vmatprep.subr.mxu0 %v121
    %256 = vmatpush1.msra.mxu0 %v120
    %257 = vmatprep.subr.mxu0 %v123
    %258 = vmatpush1.msra.mxu0 %v122
    %259 = vmatprep.subr.mxu0 %v125
    %260 = vmatpush1.msra.mxu0 %v124
    %261 = vmatprep.subr.mxu0 %v127
    %262 = vmatpush1.msra.mxu0 %v126
    %263 = vmatprep.subr.mxu0 %v129
    %264 = vmatpush1.msra.mxu0 %v128
    %265 = vmatprep.subr.mxu0 %v131
    %266 = vmatpush1.msra.mxu0 %v130
    %267 = vmatprep.subr.mxu0 %v133
    %268 = vmatpush1.msra.mxu0 %v132
    %269 = vmatprep.subr.mxu0 %v135
    %270 = vmatpush1.msra.mxu0 %v134
    %271 = vmatprep.subr.mxu0 %v137
    %272 = vmatpush1.msra.mxu0 %v136
    %273 = vmatprep.subr.mxu0 %v139
    %274 = vmatpush1.msra.mxu0 %v138
    %275 = vmatprep.subr.mxu0 %v141
    %276 = vmatpush1.msra.mxu0 %v140
    %277 = vmatprep.subr.mxu0 %v143
    %278 = vmatpush1.msra.mxu0 %v142
    %279 = vmatprep.subr.mxu0 %v145
    %280 = vmatpush1.msra.mxu0 %v144
    %281 = vmatprep.subr.mxu0 %v147
    %282 = vmatpush1.msra.mxu0 %v146
    %283 = vmatprep.subr.mxu0 %v149
    %284 = vmatpush1.msra.mxu0 %v148
    %285 = vmatprep.subr.mxu0 %v151
    %286 = vmatpush1.msra.mxu0 %v150
    %287 = vmatprep.subr.mxu0 %v153
    %288 = vmatpush1.msra.mxu0 %v152
    %289 = vmatprep.subr.mxu0 %v155
    %290 = vmatpush1.msra.mxu0 %v154
    %291 = vmatprep.subr.mxu0 %v157
    %292 = vmatpush1.msra.mxu0 %v156
    %293 = vmatprep.subr.mxu0 %v159
    %294 = vmatpush1.msra.mxu0 %v158
    %295 = vmatprep.subr.mxu0 %v161
    %296 = vmatpush1.msra.mxu0 %v160
    %297 = vmatprep.subr.mxu0 %v163
    %298 = vmatpush1.msra.mxu0 %v162
    %299 = vmatprep.subr.mxu0 %v165
    %300 = vmatpush1.msra.mxu0 %v164
    %301 = vmatprep.subr.mxu0 %v167
    %302 = vmatpush1.msra.mxu0 %v166
    %303 = vmatprep.subr.mxu0 %v169
    %304 = vmatpush1.msra.mxu0 %v168
    %305 = vmatprep.subr.mxu0 %v171
    %306 = vmatpush1.msra.mxu0 %v170
    %307 = vmatprep.subr.mxu0 %v173
    %308 = vmatpush1.msra.mxu0 %v172
    %309 = vmatprep.mubr.f32.mxu0 %v45
    %310 = vmatmul.mubr.f32.gmra.mrb[0].mxu0 %v44
    %v311 = vpop.f32.mrb[0].mxu0
    %v312 = vadd.f32 0.0, %v311
    %v313 = vpop.f32.mrb[0].mxu0
    %v314 = vadd.f32 0.0, %v313
    %315 = vdwg.mxu0
    %v316 = vmul.f32 %v42, %v241
    %v317 = vmul.f32 %v43, %v243
    %v318 = vmul.f32 %v42, %v312
    %v319 = vmul.f32 %v43, %v314
    %320 = vmatprep.subr.mxu0 %v111
    %321 = vmatpush1.msra.mxu0 %v110
    %322 = vmatprep.subr.mxu0 %v113
    %323 = vmatpush1.msra.mxu0 %v112
    %324 = vmatprep.subr.mxu0 %v115
    %325 = vmatpush1.msra.mxu0 %v114
    %326 = vmatprep.subr.mxu0 %v117
    %327 = vmatpush1.msra.mxu0 %v116
    %328 = vmatprep.subr.mxu0 %v119
    %329 = vmatpush1.msra.mxu0 %v118
    %330 = vmatprep.subr.mxu0 %v121
    %331 = vmatpush1.msra.mxu0 %v120
    %332 = vmatprep.subr.mxu0 %v123
    %333 = vmatpush1.msra.mxu0 %v122
    %334 = vmatprep.subr.mxu0 %v125
    %335 = vmatpush1.msra.mxu0 %v124
    %336 = vmatprep.subr.mxu0 %v127
    %337 = vmatpush1.msra.mxu0 %v126
    %338 = vmatprep.subr.mxu0 %v129
    %339 = vmatpush1.msra.mxu0 %v128
    %340 = vmatprep.subr.mxu0 %v131
    %341 = vmatpush1.msra.mxu0 %v130
    %342 = vmatprep.subr.mxu0 %v133
    %343 = vmatpush1.msra.mxu0 %v132
    %344 = vmatprep.subr.mxu0 %v135
    %345 = vmatpush1.msra.mxu0 %v134
    %346 = vmatprep.subr.mxu0 %v137
    %347 = vmatpush1.msra.mxu0 %v136
    %348 = vmatprep.subr.mxu0 %v139
    %349 = vmatpush1.msra.mxu0 %v138
    %350 = vmatprep.subr.mxu0 %v141
    %351 = vmatpush1.msra.mxu0 %v140
    %352 = vmatprep.subr.mxu0 %v143
    %353 = vmatpush1.msra.mxu0 %v142
    %354 = vmatprep.subr.mxu0 %v145
    %355 = vmatpush1.msra.mxu0 %v144
    %356 = vmatprep.subr.mxu0 %v147
    %357 = vmatpush1.msra.mxu0 %v146
    %358 = vmatprep.subr.mxu0 %v149
    %359 = vmatpush1.msra.mxu0 %v148
    %360 = vmatprep.subr.mxu0 %v151
    %361 = vmatpush1.msra.mxu0 %v150
    %362 = vmatprep.subr.mxu0 %v153
    %363 = vmatpush1.msra.mxu0 %v152
    %364 = vmatprep.subr.mxu0 %v155
    %365 = vmatpush1.msra.mxu0 %v154
    %366 = vmatprep.subr.mxu0 %v157
    %367 = vmatpush1.msra.mxu0 %v156
    %368 = vmatprep.subr.mxu0 %v159
    %369 = vmatpush1.msra.mxu0 %v158
    %370 = vmatprep.subr.mxu0 %v161
    %371 = vmatpush1.msra.mxu0 %v160
    %372 = vmatprep.subr.mxu0 %v163
    %373 = vmatpush1.msra.mxu0 %v162
    %374 = vmatprep.subr.mxu0 %v165
    %375 = vmatpush1.msra.mxu0 %v164
    %376 = vmatprep.subr.mxu0 %v167
    %377 = vmatpush1.msra.mxu0 %v166
    %378 = vmatprep.subr.mxu0 %v169
    %379 = vmatpush1.msra.mxu0 %v168
    %380 = vmatprep.subr.mxu0 %v171
    %381 = vmatpush1.msra.mxu0 %v170
    %382 = vmatprep.subr.mxu0 %v173
    %383 = vmatpush1.msra.mxu0 %v172
    %384 = vmatprep.mubr.f32.mxu0 %v319
    %385 = vmatmul.mubr.f32.gmra.mrb[0].mxu0 %v318
    %v386 = vpop.f32.mrb[0].mxu0
    %v387 = vadd.f32 0.0, %v386
    %v388 = vpop.f32.mrb[0].mxu0
    %v389 = vadd.f32 0.0, %v388
    %390 = vdwg.mxu0
    %391 = vmatprep.subr.mxu0 %v47
    %392 = vmatpush1.msra.mxu0 %v46
    %393 = vmatprep.subr.mxu0 %v49
    %394 = vmatpush1.msra.mxu0 %v48
    %395 = vmatprep.subr.mxu0 %v51
    %396 = vmatpush1.msra.mxu0 %v50
    %397 = vmatprep.subr.mxu0 %v53
    %398 = vmatpush1.msra.mxu0 %v52
    %399 = vmatprep.subr.mxu0 %v55
    %400 = vmatpush1.msra.mxu0 %v54
    %401 = vmatprep.subr.mxu0 %v57
    %402 = vmatpush1.msra.mxu0 %v56
    %403 = vmatprep.subr.mxu0 %v59
    %404 = vmatpush1.msra.mxu0 %v58
    %405 = vmatprep.subr.mxu0 %v61
    %406 = vmatpush1.msra.mxu0 %v60
    %407 = vmatprep.subr.mxu0 %v63
    %408 = vmatpush1.msra.mxu0 %v62
    %409 = vmatprep.subr.mxu0 %v65
    %410 = vmatpush1.msra.mxu0 %v64
    %411 = vmatprep.subr.mxu0 %v67
    %412 = vmatpush1.msra.mxu0 %v66
    %413 = vmatprep.subr.mxu0 %v69
    %414 = vmatpush1.msra.mxu0 %v68
    %415 = vmatprep.subr.mxu0 %v71
    %416 = vmatpush1.msra.mxu0 %v70
    %417 = vmatprep.subr.mxu0 %v73
    %418 = vmatpush1.msra.mxu0 %v72
    %419 = vmatprep.subr.mxu0 %v75
    %420 = vmatpush1.msra.mxu0 %v74
    %421 = vmatprep.subr.mxu0 %v77
    %422 = vmatpush1.msra.mxu0 %v76
    %423 = vmatprep.subr.mxu0 %v79
    %424 = vmatpush1.msra.mxu0 %v78
    %425 = vmatprep.subr.mxu0 %v81
    %426 = vmatpush1.msra.mxu0 %v80
    %427 = vmatprep.subr.mxu0 %v83
    %428 = vmatpush1.msra.mxu0 %v82
    %429 = vmatprep.subr.mxu0 %v85
    %430 = vmatpush1.msra.mxu0 %v84
    %431 = vmatprep.subr.mxu0 %v87
    %432 = vmatpush1.msra.mxu0 %v86
    %433 = vmatprep.subr.mxu0 %v89
    %434 = vmatpush1.msra.mxu0 %v88
    %435 = vmatprep.subr.mxu0 %v91
    %436 = vmatpush1.msra.mxu0 %v90
    %437 = vmatprep.subr.mxu0 %v93
    %438 = vmatpush1.msra.mxu0 %v92
    %439 = vmatprep.subr.mxu0 %v95
    %440 = vmatpush1.msra.mxu0 %v94
    %441 = vmatprep.subr.mxu0 %v97
    %442 = vmatpush1.msra.mxu0 %v96
    %443 = vmatprep.subr.mxu0 %v99
    %444 = vmatpush1.msra.mxu0 %v98
    %445 = vmatprep.subr.mxu0 %v101
    %446 = vmatpush1.msra.mxu0 %v100
    %447 = vmatprep.subr.mxu0 %v103
    %448 = vmatpush1.msra.mxu0 %v102
    %449 = vmatprep.subr.mxu0 %v105
    %450 = vmatpush1.msra.mxu0 %v104
    %451 = vmatprep.subr.mxu0 %v107
    %452 = vmatpush1.msra.mxu0 %v106
    %453 = vmatprep.subr.mxu0 %v109
    %454 = vmatpush1.msra.mxu0 %v108
    %455 = vmatprep.mubr.f32.mxu0 %v317
    %456 = vmatmul.mubr.f32.gmra.mrb[0].mxu0 %v316
    %v457 = vpop.f32.mrb[0].mxu0
    %v458 = vadd.f32 %v387, %v457
    %v459 = vpop.f32.mrb[0].mxu0
    %v460 = vadd.f32 %v389, %v459
    %461 = vdwg.mxu0
    %462 = vmatprep.subr.mxu0 %v47
    %463 = vmatpush1.msra.mxu0 %v46
    %464 = vmatprep.subr.mxu0 %v49
    %465 = vmatpush1.msra.mxu0 %v48
    %466 = vmatprep.subr.mxu0 %v51
    %467 = vmatpush1.msra.mxu0 %v50
    %468 = vmatprep.subr.mxu0 %v53
    %469 = vmatpush1.msra.mxu0 %v52
    %470 = vmatprep.subr.mxu0 %v55
    %471 = vmatpush1.msra.mxu0 %v54
    %472 = vmatprep.subr.mxu0 %v57
    %473 = vmatpush1.msra.mxu0 %v56
    %474 = vmatprep.subr.mxu0 %v59
    %475 = vmatpush1.msra.mxu0 %v58
    %476 = vmatprep.subr.mxu0 %v61
    %477 = vmatpush1.msra.mxu0 %v60
    %478 = vmatprep.subr.mxu0 %v63
    %479 = vmatpush1.msra.mxu0 %v62
    %480 = vmatprep.subr.mxu0 %v65
    %481 = vmatpush1.msra.mxu0 %v64
    %482 = vmatprep.subr.mxu0 %v67
    %483 = vmatpush1.msra.mxu0 %v66
    %484 = vmatprep.subr.mxu0 %v69
    %485 = vmatpush1.msra.mxu0 %v68
    %486 = vmatprep.subr.mxu0 %v71
    %487 = vmatpush1.msra.mxu0 %v70
    %488 = vmatprep.subr.mxu0 %v73
    %489 = vmatpush1.msra.mxu0 %v72
    %490 = vmatprep.subr.mxu0 %v75
    %491 = vmatpush1.msra.mxu0 %v74
    %492 = vmatprep.subr.mxu0 %v77
    %493 = vmatpush1.msra.mxu0 %v76
    %494 = vmatprep.subr.mxu0 %v79
    %495 = vmatpush1.msra.mxu0 %v78
    %496 = vmatprep.subr.mxu0 %v81
    %497 = vmatpush1.msra.mxu0 %v80
    %498 = vmatprep.subr.mxu0 %v83
    %499 = vmatpush1.msra.mxu0 %v82
    %500 = vmatprep.subr.mxu0 %v85
    %501 = vmatpush1.msra.mxu0 %v84
    %502 = vmatprep.subr.mxu0 %v87
    %503 = vmatpush1.msra.mxu0 %v86
    %504 = vmatprep.subr.mxu0 %v89
    %505 = vmatpush1.msra.mxu0 %v88
    %506 = vmatprep.subr.mxu0 %v91
    %507 = vmatpush1.msra.mxu0 %v90
    %508 = vmatprep.subr.mxu0 %v93
    %509 = vmatpush1.msra.mxu0 %v92
    %510 = vmatprep.subr.mxu0 %v95
    %511 = vmatpush1.msra.mxu0 %v94
    %512 = vmatprep.subr.mxu0 %v97
    %513 = vmatpush1.msra.mxu0 %v96
    %514 = vmatprep.subr.mxu0 %v99
    %515 = vmatpush1.msra.mxu0 %v98
    %516 = vmatprep.subr.mxu0 %v101
    %517 = vmatpush1.msra.mxu0 %v100
    %518 = vmatprep.subr.mxu0 %v103
    %519 = vmatpush1.msra.mxu0 %v102
    %520 = vmatprep.subr.mxu0 %v105
    %521 = vmatpush1.msra.mxu0 %v104
    %522 = vmatprep.subr.mxu0 %v107
    %523 = vmatpush1.msra.mxu0 %v106
    %524 = vmatprep.subr.mxu0 %v109
    %525 = vmatpush1.msra.mxu0 %v108
    %526 = vmatprep.mubr.f32.mxu0 %v319
    %527 = vmatmul.mubr.f32.gmra.mrb[0].mxu0 %v318
    %v528 = vpop.f32.mrb[0].mxu0
    %v529 = vadd.f32 0.0, %v528
    %v530 = vpop.f32.mrb[0].mxu0
    %v531 = vadd.f32 0.0, %v530
    %532 = vdwg.mxu0
    %533 = vmatprep.subr.mxu0 %v111
    %534 = vmatpush1.msra.mxu0 %v110
    %535 = vmatprep.subr.mxu0 %v113
    %536 = vmatpush1.msra.mxu0 %v112
    %537 = vmatprep.subr.mxu0 %v115
    %538 = vmatpush1.msra.mxu0 %v114
    %539 = vmatprep.subr.mxu0 %v117
    %540 = vmatpush1.msra.mxu0 %v116
    %541 = vmatprep.subr.mxu0 %v119
    %542 = vmatpush1.msra.mxu0 %v118
    %543 = vmatprep.subr.mxu0 %v121
    %544 = vmatpush1.msra.mxu0 %v120
    %545 = vmatprep.subr.mxu0 %v123
    %546 = vmatpush1.msra.mxu0 %v122
    %547 = vmatprep.subr.mxu0 %v125
    %548 = vmatpush1.msra.mxu0 %v124
    %549 = vmatprep.subr.mxu0 %v127
    %550 = vmatpush1.msra.mxu0 %v126
    %551 = vmatprep.subr.mxu0 %v129
    %552 = vmatpush1.msra.mxu0 %v128
    %553 = vmatprep.subr.mxu0 %v131
    %554 = vmatpush1.msra.mxu0 %v130
    %555 = vmatprep.subr.mxu0 %v133
    %556 = vmatpush1.msra.mxu0 %v132
    %557 = vmatprep.subr.mxu0 %v135
    %558 = vmatpush1.msra.mxu0 %v134
    %559 = vmatprep.subr.mxu0 %v137
    %560 = vmatpush1.msra.mxu0 %v136
    %561 = vmatprep.subr.mxu0 %v139
    %562 = vmatpush1.msra.mxu0 %v138
    %563 = vmatprep.subr.mxu0 %v141
    %564 = vmatpush1.msra.mxu0 %v140
    %565 = vmatprep.subr.mxu0 %v143
    %566 = vmatpush1.msra.mxu0 %v142
    %567 = vmatprep.subr.mxu0 %v145
    %568 = vmatpush1.msra.mxu0 %v144
    %569 = vmatprep.subr.mxu0 %v147
    %570 = vmatpush1.msra.mxu0 %v146
    %571 = vmatprep.subr.mxu0 %v149
    %572 = vmatpush1.msra.mxu0 %v148
    %573 = vmatprep.subr.mxu0 %v151
    %574 = vmatpush1.msra.mxu0 %v150
    %575 = vmatprep.subr.mxu0 %v153
    %576 = vmatpush1.msra.mxu0 %v152
    %577 = vmatprep.subr.mxu0 %v155
    %578 = vmatpush1.msra.mxu0 %v154
    %579 = vmatprep.subr.mxu0 %v157
    %580 = vmatpush1.msra.mxu0 %v156
    %581 = vmatprep.subr.mxu0 %v159
    %582 = vmatpush1.msra.mxu0 %v158
    %583 = vmatprep.subr.mxu0 %v161
    %584 = vmatpush1.msra.mxu0 %v160
    %585 = vmatprep.subr.mxu0 %v163
    %586 = vmatpush1.msra.mxu0 %v162
    %587 = vmatprep.subr.mxu0 %v165
    %588 = vmatpush1.msra.mxu0 %v164
    %589 = vmatprep.subr.mxu0 %v167
    %590 = vmatpush1.msra.mxu0 %v166
    %591 = vmatprep.subr.mxu0 %v169
    %592 = vmatpush1.msra.mxu0 %v168
    %593 = vmatprep.subr.mxu0 %v171
    %594 = vmatpush1.msra.mxu0 %v170
    %595 = vmatprep.subr.mxu0 %v173
    %596 = vmatpush1.msra.mxu0 %v172
    %597 = vmatprep.mubr.f32.mxu0 %v317
    %598 = vmatmul.mubr.f32.gmra.mrb[0].mxu0 %v316
    %v599 = vpop.f32.mrb[0].mxu0
    %v600 = vadd.f32 0.0, %v599
    %v601 = vpop.f32.mrb[0].mxu0
    %v602 = vadd.f32 0.0, %v601
    %603 = vdwg.mxu0
    %v604 = vsub.f32 %v529, %v600
    %v605 = vsub.f32 %v531, %v602
    %v606 = vmul.f32 %v458, %v458
    %v607 = vmul.f32 %v460, %v460
    %v608 = vmul.f32 %v604, %v604
    %v609 = vmul.f32 %v605, %v605
    %v610 = vadd.f32 %v606, %v608
    %v611 = vadd.f32 %v607, %v609
    %v612 = vrsqrt.pop %v610
    %v613 = vmul.f32 %v610, %v612
    %vm614 = vcmp.eq.f32.partialorder %v610, inf
    %v615 = vsel %vm614, %v610, %v613
    %vm616 = vcmp.eq.f32.partialorder %v610, 0.0
    %v617 = vand.u32 %v610, 2147483648
    %v618 = vsel %vm616, %v617, %v615
    %v619 = vrsqrt.pop %v611
    %v620 = vmul.f32 %v611, %v619
    %vm621 = vcmp.eq.f32.partialorder %v611, inf
    %v622 = vsel %vm621, %v611, %v620
    %vm623 = vcmp.eq.f32.partialorder %v611, 0.0
    %v624 = vand.u32 %v611, 2147483648
    %v625 = vsel %vm623, %v624, %v622
    %v626 = vld [vmem:[%s5] sm:$0xff]
    %628 = vset.pattern.permute.xlu0 0
    %629 = vperm.xlu0 %628, %v626
    %v630 = vpop.permute.xlu0 %629
    %v632 = vmul.f32 %v618, %v630
    %v633 = vmul.f32 %v625, %v630
    %v634 = vld [vmem:[%s6] sm:$0xff]
    %636 = vset.pattern.permute.xlu0 0
    %637 = vperm.xlu0 %636, %v634
    %v638 = vpop.permute.xlu0 %637
    %v640 = vmul.f32 %v40, %v638
    %v641 = vmul.f32 %v41, %v638
    %v642 = vadd.f32 %v632, %v640
    %v643 = vadd.f32 %v633, %v641
    %644 = vst [vmem:[%s7] sm:$0xff] %v642
    %645 = vst [vmem:[%s7 + $0x8] sm:$0xff] %v643
    // Predicated region
    $region34: #{fdpa.1} parent=1 // pred_check
      _
    $region35: #{fdpa.1} parent=1 // pred_check_branch
      %647 = sbr.rel (0) target = $region37
    $region36: #{fdpa.1} parent=1 // pred_region
      _
    $region37: #{fdpa.1} parent=1 // pred_fallthru
      _
    // Predicated region
    $region38: #{fdpa.1} parent=1 // pred_check
      _
    $region39: #{fdpa.1} parent=1 // pred_check_branch
      %649 = sbr.rel (0) target = $region41
    $region40: #{fdpa.1} parent=1 // pred_region
      _
    $region41: #{fdpa.1} parent=1 // pred_fallthru
      _
    %650 = vsyncpa [#allocation3], 1

</llo_original>
